<compile_context>
chip_gen: v7x
topology: tpu7x:2x2x1
jax: 0.10.0
libtpu: 0.0.40
codegen_flags: <defaults>
</compile_context>

<pallas_src>
import jax
import jax.numpy as jnp
from jax.experimental import pallas as pl
from jax.experimental.pallas import tpu as pltpu


def _drop_path_kernel(scale_ref, x_ref, o_ref):
    # scale_ref: VMEM f32 (TB, 1); x_ref / o_ref: VMEM (TB, TC).
    # f32 scale * x (any dtype) -> single downcast on store.
    o_ref[...] = (x_ref[...] * scale_ref[...]).astype(o_ref.dtype)


def _choose_tiles(B, N, itemsize, target_bytes=1 << 20):
    # Lane (last) dim: full N unless N is a multiple of 128 and larger than the target.
    if N % 128 == 0:
        tc_cap = max(128, (target_bytes // itemsize) // 128 * 128)
        TC = min(N, tc_cap)
    else:
        TC = N
    # Row (batch) dim: full B for tiny batches, else a multiple of 8 that (a) targets
    # ~target_bytes per block and (b) leaves >= 2 grid steps for megacore sharding.
    if B <= 8:
        TB = B
    else:
        rows_target = max(1, target_bytes // max(1, TC * itemsize))
        TB = max(8, (min(rows_target, B // 2) // 8) * 8)
    return TB, TC


def drop_path(x, key, drop_prob: float = 0.0, training: bool = False):
    """Pallas DropPath. x: (B, ...). Returns array of same shape/dtype."""
    if drop_prob == 0.0 or not training:
        return x

    orig_shape = x.shape
    B = int(orig_shape[0])
    N = 1
    for d in orig_shape[1:]:
        N *= int(d)

    keep_prob = 1.0 - drop_prob
    # Per-sample binary mask, same construction as torch: floor(keep_prob + U[0,1)).
    u = jax.random.uniform(key, (B,), dtype=jnp.float32)
    mask = jnp.floor(keep_prob + u)
    # Keep the scale in f32; downcast only the final product inside the kernel.
    scale = (mask / keep_prob).reshape(B, 1)  # f32 (B, 1): 0 or 1/keep_prob

    x2 = x.reshape(B, N)  # lane-dense 2-D view (wrapper reshape is free plumbing)
    itemsize = x.dtype.itemsize

    TB, TC = _choose_tiles(B, N, itemsize)
    grid = (pl.cdiv(B, TB), pl.cdiv(N, TC))

    # Double-buffered in + out blocks (+ scale + slack); only raise the scoped-VMEM
    # limit if the footprint exceeds the smallest default (v5e: 16 MiB), and keep it
    # well under v7x's 64 MiB physical VMEM.
    block_bytes = TB * TC * itemsize
    est_vmem = 4 * block_bytes + 4 * TB * 4 + (1 << 20)
    cp_kwargs = dict(dimension_semantics=("parallel", "parallel"))
    if est_vmem > (16 << 20):
        cp_kwargs["vmem_limit_bytes"] = min(est_vmem, 48 << 20)

    grid_spec = pltpu.PrefetchScalarGridSpec(
        num_scalar_prefetch=0,
        grid=grid,
        in_specs=[
            pl.BlockSpec((TB, 1), lambda i, j: (i, 0)),    # per-sample scale
            pl.BlockSpec((TB, TC), lambda i, j: (i, j)),   # x
        ],
        out_specs=pl.BlockSpec((TB, TC), lambda i, j: (i, j)),
    )

    out2 = pl.pallas_call(
        _drop_path_kernel,
        out_shape=jax.ShapeDtypeStruct((B, N), x.dtype),
        grid_spec=grid_spec,
        compiler_params=pltpu.CompilerParams(**cp_kwargs),
        cost_estimate=pl.CostEstimate(
            flops=B * N,
            transcendentals=0,
            bytes_accessed=2 * B * N * itemsize + B * 4,
        ),
    )(scale, x2)

    return out2.reshape(orig_shape)


class DropPath:
    """Mirror of the PyTorch DropPath module (no parameters)."""

    def __init__(self, drop_prob=None):
        self.drop_prob = 0.0 if drop_prob is None else float(drop_prob)
        self.training = True

    def __call__(self, x, key):
        return drop_path(x, key, self.drop_prob, self.training)


if __name__ == "__main__":
    key = jax.random.PRNGKey(0)
    k_x, k_mask = jax.random.split(key)

    B, S, D = 2, 8, 32
    x = jax.random.normal(k_x, (B, S, D), dtype=jnp.float32)

    module = DropPath(drop_prob=0.25)
    module.training = True

    out = module(x, k_mask)
    out = jax.block_until_ready(out)

    # Reference check (pure JAX, identical math).
    keep_prob = 1.0 - module.drop_prob
    u = jax.random.uniform(k_mask, (B,), dtype=jnp.float32)
    mask = jnp.floor(keep_prob + u)
    ref = x / keep_prob * mask[:, None, None]
    assert out.shape == x.shape and out.dtype == x.dtype
    assert jnp.allclose(out, ref, atol=1e-6, rtol=1e-6)

    # Eval mode is identity.
    module.training = False
    out_eval = jax.block_until_ready(module(x, k_mask))
    assert jnp.array_equal(out_eval, x)

    print("KERNEL_OK")
</pallas_src>

<mosaic_0001>
module attributes {stable_mosaic.version = 11 : i64} {
  func.func @_drop_path_kernel(%arg0: i32, %arg1: i32, %arg2: memref<2x1xf32, #tpu.memory_space<vmem>>, %arg3: memref<2x256xf32, #tpu.memory_space<vmem>>, %arg4: memref<2x256xf32, #tpu.memory_space<vmem>>) attributes {dimension_semantics = [#tpu.dimension_semantics<parallel>, #tpu.dimension_semantics<parallel>], iteration_bounds = array<i64: 1, 1>, scalar_prefetch = 0 : i64, scratch_operands = 0 : i64, tpu.core_type = #tpu.core_type<tc>, window_params = [{transform_indices = @transform_0, window_bounds = array<i64: 2, 1>}, {transform_indices = @transform_1, window_bounds = array<i64: 2, 256>}, {transform_indices = @transform_2, window_bounds = array<i64: 2, 256>}]} {
    %c0 = arith.constant 0 : index
    %c0_0 = arith.constant 0 : index
    %0 = vector.load %arg3[%c0, %c0_0] : memref<2x256xf32, #tpu.memory_space<vmem>>, vector<2x256xf32>
    %c0_1 = arith.constant 0 : index
    %c0_2 = arith.constant 0 : index
    %1 = vector.load %arg2[%c0_1, %c0_2] : memref<2x1xf32, #tpu.memory_space<vmem>>, vector<2x1xf32>
    %2 = vector.broadcast %1 : vector<2x1xf32> to vector<2x256xf32>
    %3 = arith.mulf %0, %2 : vector<2x256xf32>
    %c0_3 = arith.constant 0 : index
    %c0_4 = arith.constant 0 : index
    %4 = vector.load %arg4[%c0_3, %c0_4] : memref<2x256xf32, #tpu.memory_space<vmem>>, vector<2x256xf32>
    tpu.vector_store %arg4[%c0_3, %c0_4], %3 {strides = array<i32>} : memref<2x256xf32, #tpu.memory_space<vmem>>, vector<2x256xf32>,
    return
  }
  func.func @transform_0(%arg0: i32, %arg1: i32) -> (i32, i32) {
    %c0_i32 = arith.constant 0 : i32
    %c0_i32_0 = arith.constant 0 : i32
    return %arg0, %c0_i32 : i32, i32
  }
  func.func @transform_1(%arg0: i32, %arg1: i32) -> (i32, i32) {
    %c0_i32 = arith.constant 0 : i32
    return %arg0, %arg1 : i32, i32
  }
  func.func @transform_2(%arg0: i32, %arg1: i32) -> (i32, i32) {
    %c0_i32 = arith.constant 0 : i32
    return %arg0, %arg1 : i32, i32
  }
}

</mosaic_0001>

<llo_original>
// kernel: tpu_custom_call.1
$region0: #{tpu_custom_call.1}
  #allocation0 [shape = 'u32[]', space=smem, size = 0x4, offset = 0x4, fixed_abs, tag = 'smem constant byte address 0x4 - core index']
  #allocation1 [shape = 'u32[144,128]{1,0:T(1,128)}', space=vmem, size = 0x12000, scoped, tag = 'internal scratch']
  %s0 = inlined_call_operand.vmem [shape: f32[2,1], index: 0, kind: input, shape index: {}]
  %s1 = inlined_call_operand.vmem [shape: f32[2,256], index: 1, kind: input, shape index: {}]
  %s2 = inlined_call_operand.hbm [shape: f32[2,256], index: 2, kind: output, shape index: {}]
  %s3 = sld [smem:[#allocation0]]
  $region18: #{tpu_custom_call.1} parent=0
    _
  %s5 = ssub.s32 1, %s3
  %s6 = scalar_select 0, %s5, %s3
  $region1: #{tpu_custom_call.1} parent=0
    #allocation2 [shape = 'u8[2048]{0}', space=vmem, size = 0x800, scoped, tag = 'output window, operand 0, single buffered']
    #allocation3 [shape = 's32[1]{0}', space=sflag, size = 0x4, scoped, tag = 'scoped memory for tpu_custom_call.1']
    %7 = vsyncpa [#allocation3], 0
    // Predicated region
    $region2: #{tpu_custom_call.1} parent=1 // pred_check
      _
    $region3: #{tpu_custom_call.1} parent=1 // pred_check_branch
      %9 = sbr.rel (0) target = $region5
    $region4: #{tpu_custom_call.1} parent=1 // pred_region
      _
    $region5: #{tpu_custom_call.1} parent=1 // pred_fallthru
      _
    // Predicated region
    $region6: #{tpu_custom_call.1} parent=1 // pred_check
      _
    $region7: #{tpu_custom_call.1} parent=1 // pred_check_branch
      %11 = sbr.rel (0) target = $region9
    $region8: #{tpu_custom_call.1} parent=1 // pred_region
      _
    $region9: #{tpu_custom_call.1} parent=1 // pred_fallthru
      _
    %v12 = vld [vmem:[%s1] sm:$0xf]
    %v13 = vld [vmem:[%s0] sm:$0x3]
    %15 = vset.pattern.permute.xlu0 0
    %16 = vperm.xlu0 %15, %v13
    %v17 = vpop.permute.xlu0 %16
    %v19 = vunpack.c.l.s4 269488144
    %v20 = vunpack.c.0.s8 %v19
    %v21 = vlaneseq
    %v22 = vshrl.u32 %v21, 7
    %v23 = vsub.s32 %v20, %v22
    %v24 = vrot.slane %v17, %v23
    %v26 = vmul.f32 %v12, %v24
    %27 = vst [vmem:[#allocation2] sm:$0xf] %v26
    // Predicated region
    $region10: #{tpu_custom_call.1} parent=1 // pred_check
      _
    $region11: #{tpu_custom_call.1} parent=1 // pred_check_branch
      %29 = sbr.rel (0) target = $region13
    $region12: #{tpu_custom_call.1} parent=1 // pred_region
      %s31 = ssub.s32 64, 64
      %32 = vsyncadd [#allocation3], %s31
      %s34 = sshll.u32 [#allocation2], 4
      %s35 = int_to_ptr.vmem [resolvable:$true] %s34
      %37 = dma.vmem_to_hbm [thread:$0]  %s35, 64, %s2, [#allocation3]
    $region13: #{tpu_custom_call.1} parent=1 // pred_fallthru
      _
    // Predicated region
    $region14: #{tpu_custom_call.1} parent=1 // pred_check
      _
    $region15: #{tpu_custom_call.1} parent=1 // pred_check_branch
      %39 = sbr.rel (0) target = $region17
    $region16: #{tpu_custom_call.1} parent=1 // pred_region
      %40 = dma.done [#allocation3], 64
    $region17: #{tpu_custom_call.1} parent=1 // pred_fallthru
      _
    %41 = vsyncpa [#allocation3], 1

</llo_original>
